<compile_context>
chip_gen: v7x
topology: tpu7x:2x2x1
jax: 0.10.0
libtpu: 0.0.40
codegen_flags: <defaults>
</compile_context>

<pallas_src>
import functools
import math

import jax
import jax.numpy as jnp
from jax.experimental import pallas as pl
from jax.experimental.pallas import tpu as pltpu

LN_EPS = 1e-12
_INV_SQRT2 = 1.0 / math.sqrt(2.0)


def _erf(x, approx_recip):
    # Abramowitz & Stegun 7.1.26 rational approximation of erf
    # (max abs error ~1.5e-7).  Uses only ops with guaranteed Mosaic
    # lowerings (abs / recip / exp / mul / add / where).
    a1, a2, a3, a4, a5 = (0.254829592, -0.284496736, 1.421413741,
                          -1.453152027, 1.061405429)
    p = 0.3275911
    ax = jnp.abs(x)
    d = 1.0 + p * ax
    t = pl.reciprocal(d, approx=True) if approx_recip else 1.0 / d
    poly = ((((a5 * t + a4) * t + a3) * t + a2) * t + a1) * t
    y = 1.0 - poly * jnp.exp(-ax * ax)
    return jnp.where(x < 0.0, -y, y)


def _gelu_exact(x, approx_recip):
    # BERT gelu: x * 0.5 * (1 + erf(x / sqrt(2)))
    return x * 0.5 * (1.0 + _erf(x * _INV_SQRT2, approx_recip))


def _round_up(x, m):
    return ((x + m - 1) // m) * m


def _make_lm_head_kernel(tr, cache_all_rows, approx_recip):
    def kernel(x_ref, wd_ref, bd_ref, g_ref, b_ref, et_ref, bias_ref,
               out_ref, h_ref):
        if cache_all_rows:
            # grid = (vocab tiles [outer, arbitrary], row tiles [inner, parallel])
            vocab_step = pl.program_id(0)
            row_tile = pl.program_id(1)
            rows_sl = pl.ds(pl.multiple_of(row_tile * tr, tr), tr)
        else:
            # grid = (row tiles [outer, parallel], vocab tiles [inner, arbitrary])
            vocab_step = pl.program_id(1)
            rows_sl = slice(None)

        # The transform is independent of the vocab tile: compute it once per
        # row tile (at vocab step 0) and cache it in VMEM.
        @pl.when(vocab_step == 0)
        def _():
            h = jnp.dot(x_ref[...], wd_ref[...],
                        preferred_element_type=jnp.float32) + bd_ref[...]
            h = _gelu_exact(h, approx_recip)
            mu = jnp.mean(h, axis=-1, keepdims=True)
            var = jnp.mean((h - mu) * (h - mu), axis=-1, keepdims=True)  # biased
            h = (h - mu) * jax.lax.rsqrt(var + LN_EPS)
            h = h * g_ref[...] + b_ref[...]
            h_ref[rows_sl, :] = h.astype(h_ref.dtype)

        # Decoder (tied-embedding projection) + bias for this vocab tile (MXU).
        h = h_ref[rows_sl, :]
        out_ref[...] = (
            jnp.dot(h, et_ref[...], preferred_element_type=jnp.float32)
            + bias_ref[...]
        ).astype(out_ref.dtype)

    return kernel


def prepare_params(params, *, tile_vocab=1024, compute_dtype=jnp.bfloat16):
    """One-time param prep (outside jit): bf16 cast + vocab padding.

    Returns (prepared_params, vocab_size).  Do NOT redo this per call — the
    padding/cast of the ~100 MB decoder weight is a full HBM round trip.
    """
    H = params["wd"].shape[0]
    V = params["bias"].shape[-1]
    tn = min(tile_vocab, _round_up(V, 128))
    v_p = _round_up(V, tn)

    et = params["et"].astype(compute_dtype)               # (H, V)
    bias = params["bias"].reshape(1, V).astype(jnp.float32)
    if v_p != V:
        et = jnp.pad(et, ((0, 0), (0, v_p - V)))
        bias = jnp.pad(bias, ((0, 0), (0, v_p - V)))

    return {
        "wd": params["wd"].astype(compute_dtype),          # (H, H)
        "bd": params["bd"].reshape(1, H).astype(jnp.float32),
        "gamma": params["gamma"].reshape(1, H).astype(jnp.float32),
        "beta": params["beta"].reshape(1, H).astype(jnp.float32),
        "et": et,                                           # (H, v_p)
        "bias": bias,                                       # (1, v_p)
    }, V


@functools.partial(jax.jit, static_argnames=("vocab_size", "tile_rows",
                                             "tile_vocab", "out_dtype",
                                             "cache_all_rows"))
def bert_lm_prediction_head(hidden_states, params, *, vocab_size,
                            tile_rows=512, tile_vocab=1024,
                            out_dtype=jnp.bfloat16, cache_all_rows=None):
    """hidden_states: (..., H).  params from prepare_params (same tile_vocab).
    Returns logits of shape (..., vocab_size) in out_dtype."""
    lead_shape = hidden_states.shape[:-1]
    H = hidden_states.shape[-1]
    rows = math.prod(lead_shape) if lead_shape else 1

    compute_dtype = params["et"].dtype
    cbytes = jnp.dtype(compute_dtype).itemsize
    obytes = jnp.dtype(out_dtype).itemsize

    v_p = params["et"].shape[-1]
    assert v_p % 128 == 0, "prepare_params must pad vocab to a multiple of 128"
    tn = min(tile_vocab, v_p)
    assert tn % 128 == 0 and v_p % tn == 0, (
        "pass the same tile_vocab to prepare_params and bert_lm_prediction_head")

    # Row tile: multiple of 8 sublanes (16 when bf16-packed so the dynamic
    # scratch slice stays aligned).
    row_align = 16 if cbytes == 2 else 8
    tr = _round_up(min(tile_rows, rows), row_align)
    rows_p = _round_up(rows, tr)

    x = hidden_states.reshape(rows, H).astype(compute_dtype)
    if rows_p != rows:
        # Padded rows go through LayerNorm(gelu(bd)): finite and harmless, and
        # they are sliced off below.  A fused-loss variant must mask them.
        x = jnp.pad(x, ((0, rows_p - rows), (0, 0)))

    if cache_all_rows is None:
        # Full-rows h cache only if it fits comfortably in VMEM (v7x: 64 MiB).
        cache_all_rows = rows_p * H * cbytes <= 12 * 1024 * 1024

    n_row_tiles = rows_p // tr
    n_vocab_tiles = v_p // tn

    kernel = _make_lm_head_kernel(tr, cache_all_rows,
                                  approx_recip=(cbytes == 2))

    if cache_all_rows:
        # Vocab outer (arbitrary), rows inner (parallel): E^T slab index only
        # depends on the vocab step -> each slab is DMA'd from HBM exactly once.
        grid = (n_vocab_tiles, n_row_tiles)
        # x is consumed only at vocab step 0; pin its block index afterwards so
        # the pipeline does not keep re-streaming activations.
        x_spec = pl.BlockSpec((tr, H), lambda j, i: (jnp.where(j == 0, i, 0), 0))
        const = lambda j, i: (0, 0)
        et_spec = pl.BlockSpec((H, tn), lambda j, i: (0, j))
        bias_spec = pl.BlockSpec((1, tn), lambda j, i: (0, j))
        out_spec = pl.BlockSpec((tr, tn), lambda j, i: (i, j))
        scratch = pltpu.VMEM((rows_p, H), compute_dtype)
        dims = ("arbitrary", "parallel")      # vocab must NOT be parallel
        et_passes = 1
    else:
        # Streaming fallback for very large row counts.
        grid = (n_row_tiles, n_vocab_tiles)
        x_spec = pl.BlockSpec((tr, H), lambda i, j: (i, 0))
        const = lambda i, j: (0, 0)
        et_spec = pl.BlockSpec((H, tn), lambda i, j: (0, j))
        bias_spec = pl.BlockSpec((1, tn), lambda i, j: (0, j))
        out_spec = pl.BlockSpec((tr, tn), lambda i, j: (i, j))
        scratch = pltpu.VMEM((tr, H), compute_dtype)
        dims = ("parallel", "arbitrary")      # vocab must NOT be parallel
        et_passes = n_row_tiles

    in_specs = [
        x_spec,                                # hidden_states tile
        pl.BlockSpec((H, H), const),           # Wd    (VMEM-resident)
        pl.BlockSpec((1, H), const),           # bd    (resident)
        pl.BlockSpec((1, H), const),           # gamma (resident)
        pl.BlockSpec((1, H), const),           # beta  (resident)
        et_spec,                               # E^T vocab slab
        bias_spec,                             # bias vocab slab
    ]

    cost = pl.CostEstimate(
        flops=2 * rows_p * H * H + 2 * rows_p * H * v_p,
        transcendentals=rows_p * H,            # exp inside gelu/erf
        bytes_accessed=(rows_p * H * cbytes + H * H * cbytes + 4 * H * 4
                        + et_passes * (H * v_p * cbytes + v_p * 4)
                        + rows_p * v_p * obytes),
    )

    # Explicit scoped-VMEM budget: footprint + headroom (v5e default is only
    # 16 MiB; v7x physical is 64 MiB).
    vmem_est = ((rows_p if cache_all_rows else tr) * H * cbytes    # h cache
                + 2 * tr * H * cbytes                              # x (dbl buf)
                + 2 * H * H * cbytes                               # Wd
                + 2 * H * tn * cbytes                              # E^T slab
                + 2 * tr * tn * obytes                             # out tile
                + 8 * H * 4 + 4 * tn * 4)                          # small vecs
    vmem_limit = int(min(64 * 1024 * 1024,
                         max(32 * 1024 * 1024, vmem_est * 5 // 4)))

    out = pl.pallas_call(
        kernel,
        out_shape=jax.ShapeDtypeStruct((rows_p, v_p), out_dtype),
        grid_spec=pltpu.PrefetchScalarGridSpec(
            num_scalar_prefetch=0,
            grid=grid,
            in_specs=in_specs,
            out_specs=out_spec,
            scratch_shapes=[scratch],
        ),
        compiler_params=pltpu.CompilerParams(
            dimension_semantics=dims,
            vmem_limit_bytes=vmem_limit),
        cost_estimate=cost,
    )(x, params["wd"], params["bd"], params["gamma"], params["beta"],
      params["et"], params["bias"])

    if rows_p != rows or v_p != vocab_size:
        out = out[:rows, :vocab_size]
    return out.reshape(*lead_shape, vocab_size)


def init_params(key, hidden, vocab):
    k = jax.random.split(key, 6)
    emb = jax.random.normal(k[2], (vocab, hidden), jnp.float32) * 0.02
    return {
        # nn.Linear(hidden, hidden): stored as (in, out) for x @ Wd.
        "wd": jax.random.normal(k[0], (hidden, hidden), jnp.float32) * 0.02,
        "bd": jax.random.normal(k[1], (1, hidden), jnp.float32) * 0.02,
        # LayerNorm params (randomized to exercise broadcasting).
        "gamma": 1.0 + 0.1 * jax.random.normal(k[3], (1, hidden), jnp.float32),
        "beta": 0.1 * jax.random.normal(k[4], (1, hidden), jnp.float32),
        # decoder.weight = tied embedding weights E (vocab, hidden); kernel
        # consumes E^T (hidden, vocab).
        "et": emb.T,
        # bias Parameter (zeros in the module; random here to test the add).
        "bias": jax.random.normal(k[5], (vocab,), jnp.float32) * 0.02,
    }


def reference(hidden_states, params):
    x = hidden_states @ params["wd"] + params["bd"]
    x = x * 0.5 * (1.0 + jax.scipy.special.erf(x * _INV_SQRT2))
    mu = jnp.mean(x, axis=-1, keepdims=True)
    var = jnp.mean((x - mu) ** 2, axis=-1, keepdims=True)
    x = (x - mu) / jnp.sqrt(var + LN_EPS) * params["gamma"] + params["beta"]
    return x @ params["et"] + params["bias"]


if __name__ == "__main__":
    # Small shapes consistent with the module; chosen so both grid axes have
    # 2 tiles (exercises the h-cache indexing and the E^T streaming).
    B, S, HIDDEN, VOCAB = 2, 16, 32, 256

    key = jax.random.PRNGKey(0)
    kx, kp = jax.random.split(key)
    hidden_states = jax.random.normal(kx, (B, S, HIDDEN), jnp.float32)
    raw_params = init_params(kp, HIDDEN, VOCAB)
    ref = reference(hidden_states, raw_params)

    # 1) Production config: bf16 weights / scratch / logits, full-rows h cache.
    p_bf16, V = prepare_params(raw_params, tile_vocab=128,
                               compute_dtype=jnp.bfloat16)
    out_bf16 = bert_lm_prediction_head(hidden_states, p_bf16, vocab_size=V,
                                       tile_rows=16, tile_vocab=128,
                                       out_dtype=jnp.bfloat16)
    out_bf16 = jax.block_until_ready(out_bf16)
    assert out_bf16.shape == (B, S, VOCAB)
    assert out_bf16.dtype == jnp.bfloat16
    err = float(jnp.max(jnp.abs(out_bf16.astype(jnp.float32) - ref)))
    assert jnp.allclose(out_bf16.astype(jnp.float32), ref,
                        atol=2e-2, rtol=2e-2), f"bf16 mismatch: {err}"

    # 2) f32 parity check of the cached-rows (single E^T pass) layout.
    p_f32, V = prepare_params(raw_params, tile_vocab=128,
                              compute_dtype=jnp.float32)
    out_a = bert_lm_prediction_head(hidden_states, p_f32, vocab_size=V,
                                    tile_rows=16, tile_vocab=128,
                                    out_dtype=jnp.float32, cache_all_rows=True)
    out_a = jax.block_until_ready(out_a)
    err = float(jnp.max(jnp.abs(out_a - ref)))
    assert jnp.allclose(out_a, ref, atol=2e-5, rtol=2e-5), f"f32/A mismatch: {err}"

    # 3) f32 parity check of the streaming fallback layout.
    out_b = bert_lm_prediction_head(hidden_states, p_f32, vocab_size=V,
                                    tile_rows=16, tile_vocab=128,
                                    out_dtype=jnp.float32, cache_all_rows=False)
    out_b = jax.block_until_ready(out_b)
    err = float(jnp.max(jnp.abs(out_b - ref)))
    assert jnp.allclose(out_b, ref, atol=2e-5, rtol=2e-5), f"f32/B mismatch: {err}"

    print("KERNEL_OK")
</pallas_src>

<mosaic_0001>
module attributes {stable_mosaic.version = 11 : i64} {
  func.func @kernel(%arg0: i32, %arg1: i32, %arg2: memref<16x32xbf16, #tpu.memory_space<vmem>>, %arg3: memref<32x32xbf16, #tpu.memory_space<vmem>>, %arg4: memref<1x32xf32, #tpu.memory_space<vmem>>, %arg5: memref<1x32xf32, #tpu.memory_space<vmem>>, %arg6: memref<1x32xf32, #tpu.memory_space<vmem>>, %arg7: memref<32x128xbf16, #tpu.memory_space<vmem>>, %arg8: memref<1x128xf32, #tpu.memory_space<vmem>>, %arg9: memref<16x128xbf16, #tpu.memory_space<vmem>>, %arg10: memref<32x32xbf16, #tpu.memory_space<vmem>>) attributes {dimension_semantics = [#tpu.dimension_semantics<arbitrary>, #tpu.dimension_semantics<parallel>], iteration_bounds = array<i64: 2, 2>, scalar_prefetch = 0 : i64, scratch_operands = 1 : i64, tpu.core_type = #tpu.core_type<tc>, window_params = [{transform_indices = @transform_0, window_bounds = array<i64: 16, 32>}, {pipeline_mode = #tpu.pipeline_mode<synchronous>, transform_indices = @transform_1, window_bounds = array<i64: 32, 32>}, {pipeline_mode = #tpu.pipeline_mode<synchronous>, transform_indices = @transform_2, window_bounds = array<i64: 1, 32>}, {pipeline_mode = #tpu.pipeline_mode<synchronous>, transform_indices = @transform_3, window_bounds = array<i64: 1, 32>}, {pipeline_mode = #tpu.pipeline_mode<synchronous>, transform_indices = @transform_4, window_bounds = array<i64: 1, 32>}, {transform_indices = @transform_5, window_bounds = array<i64: 32, 128>}, {transform_indices = @transform_6, window_bounds = array<i64: 1, 128>}, {transform_indices = @transform_7, window_bounds = array<i64: 16, 128>}]} {
    %c16_i32 = arith.constant 16 : i32
    %0 = arith.muli %arg1, %c16_i32 : i32
    %1 = tpu.assume_multiple %0, 16 : i32
    %c0_i32 = arith.constant 0 : i32
    %2 = arith.cmpi eq, %arg0, %c0_i32 : i32
    %3 = arith.extui %2 : i1 to i32
    %c0_i32_0 = arith.constant 0 : i32
    %4 = arith.cmpi ne, %3, %c0_i32_0 : i32
    scf.if %4 {
      %c0_7 = arith.constant 0 : index
      %c0_8 = arith.constant 0 : index
      %14 = vector.load %arg2[%c0_7, %c0_8] : memref<16x32xbf16, #tpu.memory_space<vmem>>, vector<16x32xbf16>
      %c0_9 = arith.constant 0 : index
      %c0_10 = arith.constant 0 : index
      %15 = vector.load %arg3[%c0_9, %c0_10] : memref<32x32xbf16, #tpu.memory_space<vmem>>, vector<32x32xbf16>
      %cst_11 = arith.constant dense<0.000000e+00> : vector<16x32xf32>
      %16 = tpu.matmul %14, %15, %cst_11 {dimension_numbers = #tpu.dot_dimension_numbers<[1], [0], [0], [1], [0, 0, 1, 1], [], []>} : vector<16x32xbf16>, vector<32x32xbf16>, vector<16x32xf32> -> vector<16x32xf32>
      %c0_12 = arith.constant 0 : index
      %c0_13 = arith.constant 0 : index
      %17 = vector.load %arg4[%c0_12, %c0_13] : memref<1x32xf32, #tpu.memory_space<vmem>>, vector<1x32xf32>
      %18 = vector.broadcast %17 : vector<1x32xf32> to vector<16x32xf32>
      %19 = arith.addf %16, %18 : vector<16x32xf32>
      %cst_14 = arith.constant 5.000000e-01 : f32
      %20 = vector.broadcast %cst_14 : f32 to vector<16x32xf32>
      %21 = arith.mulf %19, %20 : vector<16x32xf32>
      %cst_15 = arith.constant 0.707106769 : f32
      %22 = vector.broadcast %cst_15 : f32 to vector<16x32xf32>
      %23 = arith.mulf %19, %22 : vector<16x32xf32>
      %24 = math.absf %23 : vector<16x32xf32>
      %cst_16 = arith.constant 0.327591091 : f32
      %25 = vector.broadcast %cst_16 : f32 to vector<16x32xf32>
      %26 = arith.mulf %25, %24 : vector<16x32xf32>
      %cst_17 = arith.constant 1.000000e+00 : f32
      %27 = vector.broadcast %cst_17 : f32 to vector<16x32xf32>
      %28 = arith.addf %27, %26 : vector<16x32xf32>
      %29 = tpu.reciprocal %28 {approx = true} : vector<16x32xf32> -> vector<16x32xf32>
      %cst_18 = arith.constant 1.06140542 : f32
      %30 = vector.broadcast %cst_18 : f32 to vector<16x32xf32>
      %31 = arith.mulf %30, %29 : vector<16x32xf32>
      %cst_19 = arith.constant -1.45315206 : f32
      %32 = vector.broadcast %cst_19 : f32 to vector<16x32xf32>
      %33 = arith.addf %31, %32 : vector<16x32xf32>
      %34 = arith.mulf %33, %29 : vector<16x32xf32>
      %cst_20 = arith.constant 1.42141378 : f32
      %35 = vector.broadcast %cst_20 : f32 to vector<16x32xf32>
      %36 = arith.addf %34, %35 : vector<16x32xf32>
      %37 = arith.mulf %36, %29 : vector<16x32xf32>
      %cst_21 = arith.constant -0.284496725 : f32
      %38 = vector.broadcast %cst_21 : f32 to vector<16x32xf32>
      %39 = arith.addf %37, %38 : vector<16x32xf32>
      %40 = arith.mulf %39, %29 : vector<16x32xf32>
      %cst_22 = arith.constant 0.254829586 : f32
      %41 = vector.broadcast %cst_22 : f32 to vector<16x32xf32>
      %42 = arith.addf %40, %41 : vector<16x32xf32>
      %43 = arith.mulf %42, %29 : vector<16x32xf32>
      %cst_23 = arith.constant 0.000000e+00 : f32
      %44 = vector.broadcast %cst_23 : f32 to vector<16x32xf32>
      %45 = arith.subf %44, %24 : vector<16x32xf32>
      %46 = arith.mulf %45, %24 : vector<16x32xf32>
      %47 = math.exp %46 : vector<16x32xf32>
      %48 = arith.mulf %43, %47 : vector<16x32xf32>
      %cst_24 = arith.constant 1.000000e+00 : f32
      %49 = vector.broadcast %cst_24 : f32 to vector<16x32xf32>
      %50 = arith.subf %49, %48 : vector<16x32xf32>
      %cst_25 = arith.constant 0.000000e+00 : f32
      %51 = vector.broadcast %cst_25 : f32 to vector<16x32xf32>
      %52 = arith.cmpf olt, %23, %51 : vector<16x32xf32>
      %cst_26 = arith.constant 0.000000e+00 : f32
      %53 = vector.broadcast %cst_26 : f32 to vector<16x32xf32>
      %54 = arith.subf %53, %50 : vector<16x32xf32>
      %55 = arith.select %52, %54, %50 : vector<16x32xi1>, vector<16x32xf32>
      %cst_27 = arith.constant 1.000000e+00 : f32
      %56 = vector.broadcast %cst_27 : f32 to vector<16x32xf32>
      %57 = arith.addf %56, %55 : vector<16x32xf32>
      %58 = arith.mulf %21, %57 : vector<16x32xf32>
      %cst_28 = arith.constant dense<0.000000e+00> : vector<16xf32>
      %59 = vector.multi_reduction <add>, %58, %cst_28 [1] : vector<16x32xf32> to vector<16xf32>
      %60 = vector.shape_cast %59 : vector<16xf32> to vector<16x1xf32>
      %cst_29 = arith.constant 3.200000e+01 : f32
      %61 = vector.broadcast %cst_29 : f32 to vector<16x1xf32>
      %62 = arith.divf %60, %61 : vector<16x1xf32>
      %63 = vector.broadcast %62 : vector<16x1xf32> to vector<16x32xf32>
      %64 = arith.subf %58, %63 : vector<16x32xf32>
      %65 = vector.broadcast %62 : vector<16x1xf32> to vector<16x32xf32>
      %66 = arith.subf %58, %65 : vector<16x32xf32>
      %67 = arith.mulf %64, %66 : vector<16x32xf32>
      %cst_30 = arith.constant dense<0.000000e+00> : vector<16xf32>
      %68 = vector.multi_reduction <add>, %67, %cst_30 [1] : vector<16x32xf32> to vector<16xf32>
      %69 = vector.shape_cast %68 : vector<16xf32> to vector<16x1xf32>
      %cst_31 = arith.constant 3.200000e+01 : f32
      %70 = vector.broadcast %cst_31 : f32 to vector<16x1xf32>
      %71 = arith.divf %69, %70 : vector<16x1xf32>
      %72 = vector.broadcast %62 : vector<16x1xf32> to vector<16x32xf32>
      %73 = arith.subf %58, %72 : vector<16x32xf32>
      %cst_32 = arith.constant 9.99999996E-13 : f32
      %74 = vector.broadcast %cst_32 : f32 to vector<16x1xf32>
      %75 = arith.addf %71, %74 : vector<16x1xf32>
      %76 = math.rsqrt %75 : vector<16x1xf32>
      %77 = vector.broadcast %76 : vector<16x1xf32> to vector<16x32xf32>
      %78 = arith.mulf %73, %77 : vector<16x32xf32>
      %c0_33 = arith.constant 0 : index
      %c0_34 = arith.constant 0 : index
      %79 = vector.load %arg5[%c0_33, %c0_34] : memref<1x32xf32, #tpu.memory_space<vmem>>, vector<1x32xf32>
      %80 = vector.broadcast %79 : vector<1x32xf32> to vector<16x32xf32>
      %81 = arith.mulf %78, %80 : vector<16x32xf32>
      %c0_35 = arith.constant 0 : index
      %c0_36 = arith.constant 0 : index
      %82 = vector.load %arg6[%c0_35, %c0_36] : memref<1x32xf32, #tpu.memory_space<vmem>>, vector<1x32xf32>
      %83 = vector.broadcast %82 : vector<1x32xf32> to vector<16x32xf32>
      %84 = arith.addf %81, %83 : vector<16x32xf32>
      %85 = arith.truncf %84 : vector<16x32xf32> to vector<16x32xbf16>
      %86 = arith.index_cast %1 : i32 to index
      %c0_37 = arith.constant 0 : index
      %87 = vector.load %arg10[%86, %c0_37] : memref<32x32xbf16, #tpu.memory_space<vmem>>, vector<16x32xbf16>
      tpu.vector_store %arg10[%86, %c0_37], %85 {strides = array<i32>} : memref<32x32xbf16, #tpu.memory_space<vmem>>, vector<16x32xbf16>,
    } else {
    }
    %5 = arith.index_cast %1 : i32 to index
    %c0 = arith.constant 0 : index
    %6 = vector.load %arg10[%5, %c0] : memref<32x32xbf16, #tpu.memory_space<vmem>>, vector<16x32xbf16>
    %c0_1 = arith.constant 0 : index
    %c0_2 = arith.constant 0 : index
    %7 = vector.load %arg7[%c0_1, %c0_2] : memref<32x128xbf16, #tpu.memory_space<vmem>>, vector<32x128xbf16>
    %cst = arith.constant dense<0.000000e+00> : vector<16x128xf32>
    %8 = tpu.matmul %6, %7, %cst {dimension_numbers = #tpu.dot_dimension_numbers<[1], [0], [0], [1], [0, 0, 1, 1], [], []>} : vector<16x32xbf16>, vector<32x128xbf16>, vector<16x128xf32> -> vector<16x128xf32>
    %c0_3 = arith.constant 0 : index
    %c0_4 = arith.constant 0 : index
    %9 = vector.load %arg8[%c0_3, %c0_4] : memref<1x128xf32, #tpu.memory_space<vmem>>, vector<1x128xf32>
    %10 = vector.broadcast %9 : vector<1x128xf32> to vector<16x128xf32>
    %11 = arith.addf %8, %10 : vector<16x128xf32>
    %12 = arith.truncf %11 : vector<16x128xf32> to vector<16x128xbf16>
    %c0_5 = arith.constant 0 : index
    %c0_6 = arith.constant 0 : index
    %13 = vector.load %arg9[%c0_5, %c0_6] : memref<16x128xbf16, #tpu.memory_space<vmem>>, vector<16x128xbf16>
    tpu.vector_store %arg9[%c0_5, %c0_6], %12 {strides = array<i32>} : memref<16x128xbf16, #tpu.memory_space<vmem>>, vector<16x128xbf16>,
    return
  }
  func.func @transform_0(%arg0: i32, %arg1: i32) -> (i32, i32) {
    %c0_i32 = arith.constant 0 : i32
    %0 = arith.cmpi eq, %arg0, %c0_i32 : i32
    %c0_i32_0 = arith.constant 0 : i32
    %1 = arith.select %0, %arg1, %c0_i32_0 : i32
    %c0_i32_1 = arith.constant 0 : i32
    %c0_i32_2 = arith.constant 0 : i32
    return %1, %c0_i32_1 : i32, i32
  }
  func.func @transform_1(%arg0: i32, %arg1: i32) -> (i32, i32) {
    %c0_i32 = arith.constant 0 : i32
    %c0_i32_0 = arith.constant 0 : i32
    %c0_i32_1 = arith.constant 0 : i32
    return %c0_i32, %c0_i32_0 : i32, i32
  }
  func.func @transform_2(%arg0: i32, %arg1: i32) -> (i32, i32) {
    %c0_i32 = arith.constant 0 : i32
    %c0_i32_0 = arith.constant 0 : i32
    %c0_i32_1 = arith.constant 0 : i32
    return %c0_i32, %c0_i32_0 : i32, i32
  }
  func.func @transform_3(%arg0: i32, %arg1: i32) -> (i32, i32) {
    %c0_i32 = arith.constant 0 : i32
    %c0_i32_0 = arith.constant 0 : i32
    %c0_i32_1 = arith.constant 0 : i32
    return %c0_i32, %c0_i32_0 : i32, i32
  }
  func.func @transform_4(%arg0: i32, %arg1: i32) -> (i32, i32) {
    %c0_i32 = arith.constant 0 : i32
    %c0_i32_0 = arith.constant 0 : i32
    %c0_i32_1 = arith.constant 0 : i32
    return %c0_i32, %c0_i32_0 : i32, i32
  }
  func.func @transform_5(%arg0: i32, %arg1: i32) -> (i32, i32) {
    %c0_i32 = arith.constant 0 : i32
    %c0_i32_0 = arith.constant 0 : i32
    return %c0_i32, %arg0 : i32, i32
  }
  func.func @transform_6(%arg0: i32, %arg1: i32) -> (i32, i32) {
    %c0_i32 = arith.constant 0 : i32
    %c0_i32_0 = arith.constant 0 : i32
    return %c0_i32, %arg0 : i32, i32
  }
  func.func @transform_7(%arg0: i32, %arg1: i32) -> (i32, i32) {
    %c0_i32 = arith.constant 0 : i32
    return %arg1, %arg0 : i32, i32
  }
}

</mosaic_0001>

<llo_original>
// kernel: bert_lm_prediction_head.1
$region0: #{bert_lm_prediction_head.1}
  #allocation0 [shape = 'u32[]', space=smem, size = 0x4, offset = 0x4, fixed_abs, tag = 'smem constant byte address 0x4 - core index']
  #allocation1 [shape = 'u32[144,128]{1,0:T(1,128)}', space=vmem, size = 0x12000, scoped, tag = 'internal scratch']
  #allocation2 [shape = 'bf16[32,32]{1,0:T(16,128)(2,1)}', space=vmem, size = 0x2000, scoped, tag = 'scratch operand']
  %s0 = inlined_call_operand.vmem [shape: bf16[32,32], index: 0, kind: input, shape index: {}]
  %s1 = inlined_call_operand.vmem [shape: bf16[32,32], index: 1, kind: input, shape index: {}]
  %s2 = inlined_call_operand.vmem [shape: f32[1,32], index: 2, kind: input, shape index: {}]
  %s3 = inlined_call_operand.vmem [shape: f32[1,32], index: 3, kind: input, shape index: {}]
  %s4 = inlined_call_operand.vmem [shape: f32[1,32], index: 4, kind: input, shape index: {}]
  %s5 = inlined_call_operand.vmem [shape: bf16[32,256], index: 5, kind: input, shape index: {}]
  %s6 = inlined_call_operand.vmem [shape: f32[1,256], index: 6, kind: input, shape index: {}]
  %s7 = inlined_call_operand.hbm [shape: bf16[32,256], index: 7, kind: output, shape index: {}]
  %s8 = sld [smem:[#allocation0]]
  $region106: #{bert_lm_prediction_head.1} parent=0
    _
  %s10 = ssub.s32 1, %s8
  %s11 = scalar_select 0, %s10, %s8
  $region1: #{bert_lm_prediction_head.1} parent=0
    #allocation3 [shape = 'u8[16384]{0}', space=vmem, size = 0x4000, scoped, tag = 'input window, operand 5']
    #allocation4 [shape = 'u8[8192]{0}', space=vmem, size = 0x2000, scoped, tag = 'output window, operand 0']
    #allocation5 [shape = 's32[2]{0}', space=sflag, size = 0x8, scoped, tag = 'scoped memory for bert_lm_prediction_head.1']
    %12 = vsyncpa [#allocation5], 0
    %s13 = scalar_lea.sflag [#allocation5], 1
    %14 = vsyncpa %s13, 0
    loop: start=0, step=1, limit=6
    $region2: #{bert_lm_prediction_head.1} parent=1 // loop_pre_header
      _
    $region3: #{bert_lm_prediction_head.1} parent=1 // loop_header
      %s16 = sphi 0, %s20
      %p17 = scmp.ge.s32.totalorder %s16, 6
      %s23 = sphi 0, %s35
      %s24 = sphi 0, %s31
      %s25 = sphi 0, %s23
      %s26 = sphi 0, %s24
      %s27 = sphi 0, %s25
      %s28 = sphi 0, %s26
      %s42 = sphi 0, %s44
      %s45 = sphi 0, %s42
      %s46 = sphi 0, %s45
      %s62 = sphi 0, %s46
      %s66 = sphi 0, %s66
      %s68 = sphi 0, %s66
      %s69 = sphi 0, %s68
      %s83 = sphi 0, %s69
      %s87 = sphi 0, %s87
      %s89 = sphi 0, %s87
      %s90 = sphi 0, %s89
      %s104 = sphi 0, %s90
      %s108 = sphi 0, %s108
      %s110 = sphi 0, %s108
      %s111 = sphi 0, %s110
      %s125 = sphi 0, %s111
      %s129 = sphi 0, %s129
      %s131 = sphi 0, %s129
      %s132 = sphi 0, %s131
      %s146 = sphi 0, %s132
      %s152 = sphi 0, %s154
      %s155 = sphi 0, %s152
      %s156 = sphi 0, %s155
      %s172 = sphi 0, %s156
      %s178 = sphi 0, %s180
      %s181 = sphi 0, %s178
      %s182 = sphi 0, %s181
      %s198 = sphi 0, %s182
      %s206 = sphi 0, %s208
      %s209 = sphi 0, %s206
      %s210 = sphi 0, %s209
      %s226 = sphi 0, %s210
    $region4: #{bert_lm_prediction_head.1} parent=1 // loop_header_branch
      %19 = sbr.rel (%p17) target = $region8
    $region5: #{bert_lm_prediction_head.1} parent=1 // loop_body
      %s21 = ssub.s32 %s16, 1
      %s22 = ssub.s32 %s16, 2
      %s29 = sadd.s32 1, %s24
      %p30 = scmp.ge.s32.totalorder %s29, 2
      %s31 = scalar_select %p30, 0, %s29
      %s32 = sadd.s32 1, %s23
      %s33 = scalar_select %p30, %s32, %s23
      %p34 = scmp.ge.s32.totalorder %s33, 2
      %s35 = scalar_select %p34, 0, %s33
      %p36 = scmp.eq.s32.totalorder %s23, 0
      %s37 = scalar_select %p36, %s24, 0
      %p38 = scmp.eq.s32.totalorder %s35, 0
      %s39 = scalar_select %p38, %s31, 0
      %s40 = ssub.s32 %s37, %s39
      %p41 = scmp.eq.s32.totalorder %s40, 0
      %s43 = sadd.s32 %s42, 1
      %s44 = scalar_select %p41, %s42, %s43
      %p47 = pneg %p41
      %p48 = scmp.eq.s32.totalorder %s16, 3
      %p49 = por %p47, %p48
      %p50 = scmp.ne.s32.totalorder %s42, %s45
      %p51 = scmp.eq.s32.totalorder %s16, 0
      %p52 = por %p50, %p51
      %p53 = scmp.ne.s32.totalorder %s42, %s45
      %p54 = scmp.eq.s32.totalorder %s21, 3
      %p55 = por %p53, %p54
      %p56 = scmp.ne.s32.totalorder %s45, %s46
      %p57 = scmp.eq.s32.totalorder %s21, 0
      %p58 = por %p56, %p57
      %p59 = scmp.ne.s32.totalorder %s45, %s46
      %p60 = scmp.eq.s32.totalorder %s22, 3
      %p61 = por %p59, %p60
      %p63 = scmp.ne.s32.totalorder %s46, %s62
      %p64 = scmp.eq.s32.totalorder %s22, 0
      %p65 = por %p63, %p64
      %s67 = sadd.s32 %s66, 1
      %p70 = scmp.eq.s32.totalorder %s16, 3
      %p71 = scmp.ne.s32.totalorder %s66, %s68
      %p72 = scmp.eq.s32.totalorder %s16, 0
      %p73 = por %p71, %p72
      %p74 = scmp.ne.s32.totalorder %s66, %s68
      %p75 = scmp.eq.s32.totalorder %s21, 3
      %p76 = por %p74, %p75
      %p77 = scmp.ne.s32.totalorder %s68, %s69
      %p78 = scmp.eq.s32.totalorder %s21, 0
      %p79 = por %p77, %p78
      %p80 = scmp.ne.s32.totalorder %s68, %s69
      %p81 = scmp.eq.s32.totalorder %s22, 3
      %p82 = por %p80, %p81
      %p84 = scmp.ne.s32.totalorder %s69, %s83
      %p85 = scmp.eq.s32.totalorder %s22, 0
      %p86 = por %p84, %p85
      %s88 = sadd.s32 %s87, 1
      %p91 = scmp.eq.s32.totalorder %s16, 3
      %p92 = scmp.ne.s32.totalorder %s87, %s89
      %p93 = scmp.eq.s32.totalorder %s16, 0
      %p94 = por %p92, %p93
      %p95 = scmp.ne.s32.totalorder %s87, %s89
      %p96 = scmp.eq.s32.totalorder %s21, 3
      %p97 = por %p95, %p96
      %p98 = scmp.ne.s32.totalorder %s89, %s90
      %p99 = scmp.eq.s32.totalorder %s21, 0
      %p100 = por %p98, %p99
      %p101 = scmp.ne.s32.totalorder %s89, %s90
      %p102 = scmp.eq.s32.totalorder %s22, 3
      %p103 = por %p101, %p102
      %p105 = scmp.ne.s32.totalorder %s90, %s104
      %p106 = scmp.eq.s32.totalorder %s22, 0
      %p107 = por %p105, %p106
      %s109 = sadd.s32 %s108, 1
      %p112 = scmp.eq.s32.totalorder %s16, 3
      %p113 = scmp.ne.s32.totalorder %s108, %s110
      %p114 = scmp.eq.s32.totalorder %s16, 0
      %p115 = por %p113, %p114
      %p116 = scmp.ne.s32.totalorder %s108, %s110
      %p117 = scmp.eq.s32.totalorder %s21, 3
      %p118 = por %p116, %p117
      %p119 = scmp.ne.s32.totalorder %s110, %s111
      %p120 = scmp.eq.s32.totalorder %s21, 0
      %p121 = por %p119, %p120
      %p122 = scmp.ne.s32.totalorder %s110, %s111
      %p123 = scmp.eq.s32.totalorder %s22, 3
      %p124 = por %p122, %p123
      %p126 = scmp.ne.s32.totalorder %s111, %s125
      %p127 = scmp.eq.s32.totalorder %s22, 0
      %p128 = por %p126, %p127
      %s130 = sadd.s32 %s129, 1
      %p133 = scmp.eq.s32.totalorder %s16, 3
      %p134 = scmp.ne.s32.totalorder %s129, %s131
      %p135 = scmp.eq.s32.totalorder %s16, 0
      %p136 = por %p134, %p135
      %p137 = scmp.ne.s32.totalorder %s129, %s131
      %p138 = scmp.eq.s32.totalorder %s21, 3
      %p139 = por %p137, %p138
      %p140 = scmp.ne.s32.totalorder %s131, %s132
      %p141 = scmp.eq.s32.totalorder %s21, 0
      %p142 = por %p140, %p141
      %p143 = scmp.ne.s32.totalorder %s131, %s132
      %p144 = scmp.eq.s32.totalorder %s22, 3
      %p145 = por %p143, %p144
      %p147 = scmp.ne.s32.totalorder %s132, %s146
      %p148 = scmp.eq.s32.totalorder %s22, 0
      %p149 = por %p147, %p148
      %s150 = ssub.s32 %s23, %s35
      %p151 = scmp.eq.s32.totalorder %s150, 0
      %s153 = sadd.s32 %s152, 1
      %s154 = scalar_select %p151, %s152, %s153
      %p157 = pneg %p151
      %p158 = scmp.eq.s32.totalorder %s16, 3
      %p159 = por %p157, %p158
      %p160 = scmp.ne.s32.totalorder %s152, %s155
      %p161 = scmp.eq.s32.totalorder %s16, 0
      %p162 = por %p160, %p161
      %p163 = scmp.ne.s32.totalorder %s152, %s155
      %p164 = scmp.eq.s32.totalorder %s21, 3
      %p165 = por %p163, %p164
      %p166 = scmp.ne.s32.totalorder %s155, %s156
      %p167 = scmp.eq.s32.totalorder %s21, 0
      %p168 = por %p166, %p167
      %p169 = scmp.ne.s32.totalorder %s155, %s156
      %p170 = scmp.eq.s32.totalorder %s22, 3
      %p171 = por %p169, %p170
      %p173 = scmp.ne.s32.totalorder %s156, %s172
      %p174 = scmp.eq.s32.totalorder %s22, 0
      %p175 = por %p173, %p174
      %s176 = ssub.s32 %s23, %s35
      %p177 = scmp.eq.s32.totalorder %s176, 0
      %s179 = sadd.s32 %s178, 1
      %s180 = scalar_select %p177, %s178, %s179
      %p183 = pneg %p177
      %p184 = scmp.eq.s32.totalorder %s16, 3
      %p185 = por %p183, %p184
      %p186 = scmp.ne.s32.totalorder %s178, %s181
      %p187 = scmp.eq.s32.totalorder %s16, 0
      %p188 = por %p186, %p187
      %p189 = scmp.ne.s32.totalorder %s178, %s181
      %p190 = scmp.eq.s32.totalorder %s21, 3
      %p191 = por %p189, %p190
      %p192 = scmp.ne.s32.totalorder %s181, %s182
      %p193 = scmp.eq.s32.totalorder %s21, 0
      %p194 = por %p192, %p193
      %p195 = scmp.ne.s32.totalorder %s181, %s182
      %p196 = scmp.eq.s32.totalorder %s22, 3
      %p197 = por %p195, %p196
      %p199 = scmp.ne.s32.totalorder %s182, %s198
      %p200 = scmp.eq.s32.totalorder %s22, 0
      %p201 = por %p199, %p200
      %s202 = ssub.s32 %s24, %s31
      %s203 = ssub.s32 %s23, %s35
      %s204 = sor.u32 %s202, %s203
      %p205 = scmp.eq.s32.totalorder %s204, 0
      %s207 = sadd.s32 %s206, 1
      %s208 = scalar_select %p205, %s206, %s207
      %p211 = pneg %p205
      %p212 = scmp.eq.s32.totalorder %s16, 3
      %p213 = por %p211, %p212
      %p214 = scmp.ne.s32.totalorder %s206, %s209
      %p215 = scmp.eq.s32.totalorder %s16, 0
      %p216 = por %p214, %p215
      %p217 = scmp.ne.s32.totalorder %s206, %s209
      %p218 = scmp.eq.s32.totalorder %s21, 3
      %p219 = por %p217, %p218
      %p220 = scmp.ne.s32.totalorder %s209, %s210
      %p221 = scmp.eq.s32.totalorder %s21, 0
      %p222 = por %p220, %p221
      %p223 = scmp.ne.s32.totalorder %s209, %s210
      %p224 = scmp.eq.s32.totalorder %s22, 3
      %p225 = por %p223, %p224
      %p227 = scmp.ne.s32.totalorder %s210, %s226
      %p228 = scmp.eq.s32.totalorder %s22, 0
      %p229 = por %p227, %p228
      %p230 = scmp.le.s32.totalorder 1, %s16
      %p231 = scmp.lt.s32.totalorder %s16, 5
      %p232 = pnand %p230, %p231
      %p233 = pneg %p232
      // Predicated region
      $region9: #{bert_lm_prediction_head.1} parent=5 // pred_check
        _
      $region10: #{bert_lm_prediction_head.1} parent=5 // pred_check_branch
        %235 = sbr.rel (%p232) target = $region12
      $region11: #{bert_lm_prediction_head.1} parent=5 // pred_region
        %s236 = ssub.s32 %s16, 1
        // Predicated region
        $region13: #{bert_lm_prediction_head.1} parent=11 // pred_check
          %p237 = pneg %p79
        $region14: #{bert_lm_prediction_head.1} parent=11 // pred_check_branch
          %239 = sbr.rel (%p237) target = $region16
        $region15: #{bert_lm_prediction_head.1} parent=11 // pred_region
          _
        $region16: #{bert_lm_prediction_head.1} parent=11 // pred_fallthru
          _
        // Predicated region
        $region17: #{bert_lm_prediction_head.1} parent=11 // pred_check
          %p240 = pneg %p100
        $region18: #{bert_lm_prediction_head.1} parent=11 // pred_check_branch
          %242 = sbr.rel (%p240) target = $region20
        $region19: #{bert_lm_prediction_head.1} parent=11 // pred_region
          _
        $region20: #{bert_lm_prediction_head.1} parent=11 // pred_fallthru
          _
        // Predicated region
        $region21: #{bert_lm_prediction_head.1} parent=11 // pred_check
          %p243 = pneg %p121
        $region22: #{bert_lm_prediction_head.1} parent=11 // pred_check_branch
          %245 = sbr.rel (%p243) target = $region24
        $region23: #{bert_lm_prediction_head.1} parent=11 // pred_region
          _
        $region24: #{bert_lm_prediction_head.1} parent=11 // pred_fallthru
          _
        // Predicated region
        $region25: #{bert_lm_prediction_head.1} parent=11 // pred_check
          %p246 = pneg %p142
        $region26: #{bert_lm_prediction_head.1} parent=11 // pred_check_branch
          %248 = sbr.rel (%p246) target = $region28
        $region27: #{bert_lm_prediction_head.1} parent=11 // pred_region
          _
        $region28: #{bert_lm_prediction_head.1} parent=11 // pred_fallthru
          _
      $region12: #{bert_lm_prediction_head.1} parent=5 // pred_fallthru
        _
      %p249 = scmp.lt.s32.totalorder %s16, 4
      // Predicated region
      $region29: #{bert_lm_prediction_head.1} parent=5 // pred_check
        %p250 = pneg %p249
      $region30: #{bert_lm_prediction_head.1} parent=5 // pred_check_branch
        %252 = sbr.rel (%p250) target = $region32
      $region31: #{bert_lm_prediction_head.1} parent=5 // pred_region
        // Predicated region
        $region33: #{bert_lm_prediction_head.1} parent=31 // pred_check
          %p253 = pneg %p52
        $region34: #{bert_lm_prediction_head.1} parent=31 // pred_check_branch
          %255 = sbr.rel (%p253) target = $region36
        $region35: #{bert_lm_prediction_head.1} parent=31 // pred_region
          %p256 = scmp.eq.s32.totalorder %s23, 0
          %s257 = scalar_select %p256, %s24, 0
          %s258 = smul.u32 2, %s257
          %p259 = scmp.lt.s32.totalorder %s258, 3
          %s260 = scalar_select %p259, %s258, 3
          %s261 = smul.addr %s260, 4
          %s262 = scalar_lea.vmem %s0, %s261
          %p263 = scmp.eq.s32.totalorder %s23, 0
          %s264 = scalar_select %p263, %s24, 0
          %s265 = smul.u32 2, %s264
        $region36: #{bert_lm_prediction_head.1} parent=31 // pred_fallthru
          _
        // Predicated region
        $region37: #{bert_lm_prediction_head.1} parent=31 // pred_check
          %p266 = pneg %p162
        $region38: #{bert_lm_prediction_head.1} parent=31 // pred_check_branch
          %268 = sbr.rel (%p266) target = $region40
        $region39: #{bert_lm_prediction_head.1} parent=31 // pred_region
          %s269 = sand.u32 %s152, 1
          %s270 = sand.u32 %s152, 1
          %s271 = smul.addr %s270, 16
          %s272 = scalar_lea.vmem [#allocation3], %s271
          %s273 = smul.addr %s23, 4
          %s274 = scalar_lea.vmem %s5, %s273
          // Predicated region
          $region41: #{bert_lm_prediction_head.1} parent=39 // pred_check
            _
          $region42: #{bert_lm_prediction_head.1} parent=39 // pred_check_branch
            %276 = sbr.rel (0) target = $region44
          $region43: #{bert_lm_prediction_head.1} parent=39 // pred_region
            // Predicated region
            $region45: #{bert_lm_prediction_head.1} parent=43 // pred_check
              _
            $region46: #{bert_lm_prediction_head.1} parent=43 // pred_check_branch
              %278 = sbr.rel target = $region48
            $region47: #{bert_lm_prediction_head.1} parent=43 // pred_region
              // Predicated region
              $region60: #{bert_lm_prediction_head.1} parent=47 // pred_check
                _
              $region61: #{bert_lm_prediction_head.1} parent=47 // pred_check_branch
                %299 = sbr.rel (0) target = $region63
              $region62: #{bert_lm_prediction_head.1} parent=47 // pred_region
                loop: start=0, step=1, limit=1
                $region64: #{bert_lm_prediction_head.1} parent=62 // loop_pre_header
                  _
                $region65: #{bert_lm_prediction_head.1} parent=62 // loop_header
                  %s301 = sphi 0, %s305
                  %p302 = scmp.ge.s32.totalorder %s301, 1
                  %s306 = sphi %s274, %s274
                  %s307 = sphi %s272, %s272
                $region66: #{bert_lm_prediction_head.1} parent=62 // loop_header_branch
                  %304 = sbr.rel (%p302) target = $region70
                $region67: #{bert_lm_prediction_head.1} parent=62 // loop_body
                  _
                $region68: #{bert_lm_prediction_head.1} parent=62 // loop_footer
                  %s305 = sadd.s32 1, %s301
                $region69: #{bert_lm_prediction_head.1} parent=62 // loop_footer_branch
                  %300 = sbr.rel target = $region65
                $region70: #{bert_lm_prediction_head.1} parent=62 // loop_exit
                  _
                loop: start=0, step=1, limit=1
                $region71: #{bert_lm_prediction_head.1} parent=62 // loop_pre_header
                  _
                $region72: #{bert_lm_prediction_head.1} parent=62 // loop_header
                  %s310 = sphi 0, %s314
                  %p311 = scmp.ge.s32.totalorder %s310, 1
                  %s315 = sphi %s274, %s274
                  %s316 = sphi %s272, %s272
                $region73: #{bert_lm_prediction_head.1} parent=62 // loop_header_branch
                  %313 = sbr.rel (%p311) target = $region77
                $region74: #{bert_lm_prediction_head.1} parent=62 // loop_body
                  %v317 = vld [vmem:[%s315] sm:$0xf]
                  %318 = vst [vmem:[%s316] sm:$0xf] %v317
                  %v319 = vld [vmem:[%s315 + $0x8] sm:$0xf]
                  %320 = vst [vmem:[%s316 + $0x4] sm:$0xf] %v319
                  %v321 = vld [vmem:[%s315 + $0x10] sm:$0xf]
                  %322 = vst [vmem:[%s316 + $0x8] sm:$0xf] %v321
                  %v323 = vld [vmem:[%s315 + $0x18] sm:$0xf]
                  %324 = vst [vmem:[%s316 + $0xc] sm:$0xf] %v323
                $region75: #{bert_lm_prediction_head.1} parent=62 // loop_footer
                  %s314 = sadd.s32 1, %s310
                $region76: #{bert_lm_prediction_head.1} parent=62 // loop_footer_branch
                  %309 = sbr.rel target = $region72
                $region77: #{bert_lm_prediction_head.1} parent=62 // loop_exit
                  _
              $region63: #{bert_lm_prediction_head.1} parent=47 // pred_fallthru
                _
            $region48: #{bert_lm_prediction_head.1} parent=43 // pred_fallthru
              _
            // Predicated region
            $region49: #{bert_lm_prediction_head.1} parent=43 // pred_check
              _
            $region50: #{bert_lm_prediction_head.1} parent=43 // pred_check_branch
              %280 = sbr.rel (0) target = $region52
            $region51: #{bert_lm_prediction_head.1} parent=43 // pred_region
              loop: start=0, step=1, limit=1
              $region53: #{bert_lm_prediction_head.1} parent=51 // loop_pre_header
                _
              $region54: #{bert_lm_prediction_head.1} parent=51 // loop_header
                %s283 = sphi 0, %s287
                %p284 = scmp.ge.s32.totalorder %s283, 1
                %s288 = sphi %s274, %s274
                %s289 = sphi %s272, %s272
              $region55: #{bert_lm_prediction_head.1} parent=51 // loop_header_branch
                %286 = sbr.rel (%p284) target = $region59
              $region56: #{bert_lm_prediction_head.1} parent=51 // loop_body
                %v290 = vld [vmem:[%s288] sm:$0xf]
                %291 = vst [vmem:[%s289] sm:$0xf] %v290
                %v292 = vld [vmem:[%s288 + $0x8] sm:$0xf]
                %293 = vst [vmem:[%s289 + $0x4] sm:$0xf] %v292
                %v294 = vld [vmem:[%s288 + $0x10] sm:$0xf]
                %295 = vst [vmem:[%s289 + $0x8] sm:$0xf] %v294
                %v296 = vld [vmem:[%s288 + $0x18] sm:$0xf]
                %297 = vst [vmem:[%s289 + $0xc] sm:$0xf] %v296
              $region57: #{bert_lm_prediction_head.1} parent=51 // loop_footer
                %s287 = sadd.s32 1, %s283
              $region58: #{bert_lm_prediction_head.1} parent=51 // loop_footer_branch
                %282 = sbr.rel target = $region54
              $region59: #{bert_lm_prediction_head.1} parent=51 // loop_exit
                _
            $region52: #{bert_lm_prediction_head.1} parent=43 // pred_fallthru
              _
          $region44: #{bert_lm_prediction_head.1} parent=39 // pred_fallthru
            _
          %325 = vnop
        $region40: #{bert_lm_prediction_head.1} parent=31 // pred_fallthru
          _
        // Predicated region
        $region78: #{bert_lm_prediction_head.1} parent=31 // pred_check
          %p326 = pneg %p188
        $region79: #{bert_lm_prediction_head.1} parent=31 // pred_check_branch
          %328 = sbr.rel (%p326) target = $region81
        $region80: #{bert_lm_prediction_head.1} parent=31 // pred_region
          %p329 = scmp.lt.s32.totalorder %s23, 1
          %s330 = scalar_select %p329, %s23, 1
          %s331 = scalar_lea.vmem %s6, %s330
        $region81: #{bert_lm_prediction_head.1} parent=31 // pred_fallthru
          _
      $region32: #{bert_lm_prediction_head.1} parent=5 // pred_fallthru
        _
      %p332 = scmp.le.s32.totalorder 1, %s16
      %p333 = scmp.lt.s32.totalorder %s16, 5
      %p334 = pnand %p332, %p333
      %p335 = pneg %p334
      // Predicated region
      $region82: #{bert_lm_prediction_head.1} parent=5 // pred_check
        _
      $region83: #{bert_lm_prediction_head.1} parent=5 // pred_check_branch
        %337 = sbr.rel (%p334) target = $region85
      $region84: #{bert_lm_prediction_head.1} parent=5 // pred_region
        %s338 = ssub.s32 %s16, 1
        %s339 = sand.u32 %s155, 1
        %s340 = sand.u32 %s155, 1
        %s341 = smul.addr %s340, 16
        %s342 = scalar_lea.vmem [#allocation3], %s341
        // Predicated region
        $region86: #{bert_lm_prediction_head.1} parent=84 // pred_check
          %p343 = pneg %p168
        $region87: #{bert_lm_prediction_head.1} parent=84 // pred_check_branch
          %345 = sbr.rel (%p343) target = $region89
        $region88: #{bert_lm_prediction_head.1} parent=84 // pred_region
          _
        $region89: #{bert_lm_prediction_head.1} parent=84 // pred_fallthru
          _
        %p346 = scmp.eq.s32.totalorder %s25, 0
        %s347 = scalar_select %p346, %s26, 0
        %s348 = smul.u32 2, %s347
        %p349 = scmp.lt.s32.totalorder %s348, 3
        %s350 = scalar_select %p349, %s348, 3
        %s351 = smul.addr %s350, 4
        %s352 = scalar_lea.vmem %s0, %s351
        %p353 = pneg %p58
        %p354 = pneg %p55
        %p355 = pneg %p79
        %p356 = pneg %p76
        %p357 = pneg %p100
        %p358 = pneg %p97
        %p359 = pneg %p121
        %p360 = pneg %p118
        %p361 = pneg %p142
        %p362 = pneg %p139
        %s363 = sand.u32 %s155, 1
        %s364 = sand.u32 %s155, 1
        %s365 = smul.addr %s364, 16
        %s366 = scalar_lea.vmem [#allocation3], %s365
        %p367 = pneg %p168
        %p368 = pneg %p165
        %p369 = scmp.lt.s32.totalorder %s25, 1
        %s370 = scalar_select %p369, %s25, 1
        %s371 = scalar_lea.vmem %s6, %s370
        %p372 = pneg %p194
        %p373 = pneg %p191
        %p374 = pneg %p222
        %p375 = pneg %p219
        %s376 = sand.u32 %s209, 1
        %s377 = scalar_lea.sflag [#allocation5], %s376
        %s378 = sand.u32 %s209, 1
        %s379 = smul.addr %s378, 8
        %s380 = scalar_lea.vmem [#allocation4], %s379
        %p381 = scmp.eq.s32.totalorder %s25, 0
        %s382 = scalar_select %p381, %s26, 0
        %s383 = smul.u32 2, %s382
        %p384 = scmp.lt.s32.totalorder %s383, 3
        %s385 = scalar_select %p384, %s383, 3
        %s386 = smul.addr %s385, 4
        %s387 = scalar_lea.vmem %s0, %s386
        %p388 = scmp.eq.s32.totalorder %s25, 0
        %s389 = scalar_select %p388, %s26, 0
        %s390 = smul.u32 2, %s389
        %p391 = scmp.lt.s32.totalorder %s25, 1
        %s392 = scalar_select %p391, %s25, 1
        %s393 = scalar_lea.vmem %s6, %s392
        %s394 = smul.u32 2, %s26
        %s396 = smul.u32 %s26, 16
        %p397 = scmp.eq.s32.totalorder %s25, 0
        // Predicated region
        $region90: #{bert_lm_prediction_head.1} parent=84 // pred_check
          %p398 = pneg %p397
        $region91: #{bert_lm_prediction_head.1} parent=84 // pred_check_branch
          %400 = sbr.rel (%p398) target = $region93
        $region92: #{bert_lm_prediction_head.1} parent=84 // pred_region
          %v401 = vld [vmem:[%s387] sm:$0xf]
          %v402 = vld [vmem:[%s387 + $0x4] sm:$0xf]
          %v403 = vld [vmem:[%s1] sm:$0xf]
          %v404 = vld [vmem:[%s1 + $0x4] sm:$0xf]
          %v405 = vld [vmem:[%s1 + $0x8] sm:$0xf]
          %v406 = vld [vmem:[%s1 + $0xc] sm:$0xf]
          %v407 = vld [vmem:[%s2] sm:$0x1]
          %v409 = vlaneseq
          %v410 = vshrl.u32 %v409, 7
          %v411 = vsub.s32 0, %v410
          %v412 = vrot.slane %v407, %v411
          %v416 = vunpack.c.l.b16 %v401
          %v417 = vunpack.c.l.b16 %v402
          %v418 = vpack.c.b16 %v417, %v416
          %v423 = vunpack.c.l.b16 %v403
          %v424 = vunpack.c.l.b16 %v404
          %v425 = vunpack.c.l.b16 %v405
          %v426 = vunpack.c.l.b16 %v406
          %v427 = vpack.c.b16 %v424, %v423
          %v428 = vpack.c.b16 %v426, %v425
          %vm431 = vcmask 261120
          %v433 = vsel %vm431, %v418, 0
          %435 = vmatprep.subr.bf16.mxu0 0
          %436 = vmatpush1.bf16.msra.mxu0 %v427
          %437 = vmatprep.subr.bf16.mxu0 0
          %438 = vmatpush1.bf16.msra.mxu0 %v428
          %439 = vmatprep.subr.bf16.mxu0 0
          %440 = vmatpush1.bf16.msra.mxu0 0
          %441 = vmatprep.subr.bf16.mxu0 0
          %442 = vmatpush1.bf16.msra.mxu0 0
          %443 = vmatprep.subr.bf16.mxu0 0
          %444 = vmatpush1.bf16.msra.mxu0 0
          %445 = vmatprep.subr.bf16.mxu0 0
          %446 = vmatpush1.bf16.msra.mxu0 0
          %447 = vmatprep.subr.bf16.mxu0 0
          %448 = vmatpush1.bf16.msra.mxu0 0
          %449 = vmatprep.subr.bf16.mxu0 0
          %450 = vmatpush1.bf16.msra.mxu0 0
          %451 = vmatprep.subr.bf16.mxu0 0
          %452 = vmatpush1.bf16.msra.mxu0 0
          %453 = vmatprep.subr.bf16.mxu0 0
          %454 = vmatpush1.bf16.msra.mxu0 0
          %455 = vmatprep.subr.bf16.mxu0 0
          %456 = vmatpush1.bf16.msra.mxu0 0
          %457 = vmatprep.subr.bf16.mxu0 0
          %458 = vmatpush1.bf16.msra.mxu0 0
          %459 = vmatprep.subr.bf16.mxu0 0
          %460 = vmatpush1.bf16.msra.mxu0 0
          %461 = vmatprep.subr.bf16.mxu0 0
          %462 = vmatpush1.bf16.msra.mxu0 0
          %463 = vmatprep.subr.bf16.mxu0 0
          %464 = vmatpush1.bf16.msra.mxu0 0
          %465 = vmatprep.subr.bf16.mxu0 0
          %466 = vmatpush1.bf16.msra.mxu0 0
          %467 = vmatprep.mubr.bf16.mxu0 0
          %468 = vmatmul.mubr.bf16.gmra.mrb[0].mxu0 %v433
          %v469 = vpop.f32.mrb[0].mxu0
          %v470 = vadd.f32 %v412, %v469
          %v471 = vpop.f32.mrb[0].mxu0
          %v472 = vpop.f32.mrb[0].mxu0
          %v473 = vadd.f32 %v412, %v472
          %v474 = vpop.f32.mrb[0].mxu0
          %475 = vdwg.mxu0
          %v476 = vmul.f32 %v470, 0.5
          %v477 = vmul.f32 %v473, 0.5
          %v478 = vmul.f32 %v470, 0.70710677
          %v479 = vmul.f32 %v473, 0.70710677
          %v480 = vand.u32 2147483647, %v478
          %v481 = vand.u32 2147483647, %v479
          %v482 = vmul.f32 %v480, 0.3275911
          %v483 = vmul.f32 %v481, 0.3275911
          %v484 = vadd.f32 %v482, 1.0
          %v485 = vadd.f32 %v483, 1.0
          %v486 = vrcp.pop %v484
          %v487 = vrcp.pop %v485
          %v488 = vmul.f32 %v486, 1.0614054
          %v489 = vmul.f32 %v487, 1.0614054
          %v490 = vadd.f32 %v488, -1.4531521
          %v491 = vadd.f32 %v489, -1.4531521
          %v492 = vmul.f32 %v490, %v486
          %v493 = vmul.f32 %v491, %v487
          %v494 = vadd.f32 %v492, 1.4214138
          %v495 = vadd.f32 %v493, 1.4214138
          %v496 = vmul.f32 %v494, %v486
          %v497 = vmul.f32 %v495, %v487
          %v498 = vadd.f32 %v496, -0.28449672
          %v499 = vadd.f32 %v497, -0.28449672
          %v500 = vmul.f32 %v498, %v486
          %v501 = vmul.f32 %v499, %v487
          %v502 = vadd.f32 %v500, 0.2548296
          %v503 = vadd.f32 %v501, 0.2548296
          %v504 = vmul.f32 %v502, %v486
          %v505 = vmul.f32 %v503, %v487
          %v506 = vsub.f32 0.0, %v480
          %v507 = vsub.f32 0.0, %v481
          %v508 = vmul.f32 %v506, %v480
          %v509 = vmul.f32 %v507, %v481
          %v510 = vmul.f32 %v508, 1.442695
          %v511 = vpow.pop %v510
          %v512 = vmul.f32 %v509, 1.442695
          %v513 = vpow.pop %v512
          %v514 = vmul.f32 %v504, %v511
          %v515 = vmul.f32 %v505, %v513
          %v516 = vsub.f32 1.0, %v514
          %v517 = vsub.f32 1.0, %v515
          %vm518 = vcmp.lt.f32.partialorder %v478, 0.0
          %vm519 = vcmp.lt.f32.partialorder %v479, 0.0
          %v520 = vsub.f32 0.0, %v516
          %v521 = vsub.f32 0.0, %v517
          %v522 = vsel %vm518, %v520, %v516
          %v523 = vsel %vm519, %v521, %v517
          %v524 = vadd.f32 %v522, 1.0
          %v525 = vadd.f32 %v523, 1.0
          %v526 = vmul.f32 %v476, %v524
          %v527 = vmul.f32 %v477, %v525
          %v528 = vsel %vm431, %v526, 0.0
          %529 = vadd.xlane.f32.xlu0 %v528
          %v530 = vpop.xlane.xlu0 %529
          %v531 = vsel %vm431, %v527, 0.0
          %532 = vadd.xlane.f32.xlu0 %v531
          %v533 = vpop.xlane.xlu0 %532
          %v534 = vrcp.pop 32.0
          %v535 = vmul.f32 %v530, %v534
          %v536 = vmul.f32 %v533, %v534
          %v537 = vsub.f32 %v526, %v535
          %v538 = vsub.f32 %v527, %v536
          %v539 = vmul.f32 %v537, %v537
          %v540 = vmul.f32 %v538, %v538
          %v541 = vsel %vm431, %v539, 0.0
          %542 = vadd.xlane.f32.xlu0 %v541
          %v543 = vpop.xlane.xlu0 %542
          %v544 = vsel %vm431, %v540, 0.0
          %545 = vadd.xlane.f32.xlu0 %v544
          %v546 = vpop.xlane.xlu0 %545
          %v547 = vmul.f32 %v543, %v534
          %v548 = vmul.f32 %v546, %v534
          %v549 = vadd.f32 %v547, 1e-12
          %v550 = vadd.f32 %v548, 1e-12
          %v551 = vrsqrt.pop %v549
          %v552 = vrsqrt.pop %v550
          %v553 = vmul.f32 %v537, %v551
          %v554 = vmul.f32 %v538, %v552
          %v555 = vld [vmem:[%s3] sm:$0x1]
          %v557 = vlaneseq
          %v558 = vshrl.u32 %v557, 7
          %v559 = vsub.s32 0, %v558
          %v560 = vrot.slane %v555, %v559
          %v562 = vmul.f32 %v553, %v560
          %v563 = vmul.f32 %v554, %v560
          %v564 = vld [vmem:[%s4] sm:$0x1]
          %v566 = vlaneseq
          %v567 = vshrl.u32 %v566, 7
          %v568 = vsub.s32 0, %v567
          %v569 = vrot.slane %v564, %v568
          %v571 = vadd.f32 %v562, %v569
          %v572 = vadd.f32 %v563, %v569
          %v573 = vpack.c.bf16 %v572, %v571
          %s574 = sshra.s32 %s396, 4
          %s575 = sand.u32 %s396, 15
          %s576 = smul.addr %s574, 8
          %s577 = scalar_lea.vmem [#allocation2], %s576
          %578 = vst.msk [vmem:[%s577] sm:$0xff] %vm431, %v573
        $region93: #{bert_lm_prediction_head.1} parent=84 // pred_fallthru
          _
        %s579 = sshra.s32 %s396, 4
        %s580 = sand.u32 %s396, 15
        %s581 = smul.addr %s579, 8
        %s582 = scalar_lea.vmem [#allocation2], %s581
        %v583 = vld [vmem:[%s582] sm:$0xff]
        %v584 = vld [vmem:[%s342] sm:$0xf]
        %v585 = vld [vmem:[%s342 + $0x4] sm:$0xf]
        %v586 = vld [vmem:[%s342 + $0x8] sm:$0xf]
        %v587 = vld [vmem:[%s342 + $0xc] sm:$0xf]
        %v588 = vld [vmem:[%s393] sm:$0x1]
        %v590 = vlaneseq
        %v591 = vshrl.u32 %v590, 7
        %v592 = vsub.s32 0, %v591
        %v593 = vrot.slane %v588, %v592
        %v599 = vunpack.c.l.b16 %v584
        %v600 = vunpack.c.l.b16 %v585
        %v601 = vunpack.c.l.b16 %v586
        %v602 = vunpack.c.l.b16 %v587
        %v603 = vpack.c.b16 %v600, %v599
        %v604 = vpack.c.b16 %v602, %v601
        %vm607 = vcmask 261120
        %v609 = vsel %vm607, %v583, 0
        %611 = vmatprep.subr.bf16.mxu0 0
        %612 = vmatpush1.bf16.msra.mxu0 %v603
        %613 = vmatprep.subr.bf16.mxu0 0
        %614 = vmatpush1.bf16.msra.mxu0 %v604
        %615 = vmatprep.subr.bf16.mxu0 0
        %616 = vmatpush1.bf16.msra.mxu0 0
        %617 = vmatprep.subr.bf16.mxu0 0
        %618 = vmatpush1.bf16.msra.mxu0 0
        %619 = vmatprep.subr.bf16.mxu0 0
        %620 = vmatpush1.bf16.msra.mxu0 0
        %621 = vmatprep.subr.bf16.mxu0 0
        %622 = vmatpush1.bf16.msra.mxu0 0
        %623 = vmatprep.subr.bf16.mxu0 0
        %624 = vmatpush1.bf16.msra.mxu0 0
        %625 = vmatprep.subr.bf16.mxu0 0
        %626 = vmatpush1.bf16.msra.mxu0 0
        %627 = vmatprep.subr.bf16.mxu0 0
        %628 = vmatpush1.bf16.msra.mxu0 0
        %629 = vmatprep.subr.bf16.mxu0 0
        %630 = vmatpush1.bf16.msra.mxu0 0
        %631 = vmatprep.subr.bf16.mxu0 0
        %632 = vmatpush1.bf16.msra.mxu0 0
        %633 = vmatprep.subr.bf16.mxu0 0
        %634 = vmatpush1.bf16.msra.mxu0 0
        %635 = vmatprep.subr.bf16.mxu0 0
        %636 = vmatpush1.bf16.msra.mxu0 0
        %637 = vmatprep.subr.bf16.mxu0 0
        %638 = vmatpush1.bf16.msra.mxu0 0
        %639 = vmatprep.subr.bf16.mxu0 0
        %640 = vmatpush1.bf16.msra.mxu0 0
        %641 = vmatprep.subr.bf16.mxu0 0
        %642 = vmatpush1.bf16.msra.mxu0 0
        %643 = vmatprep.mubr.bf16.mxu0 0
        %644 = vmatmul.mubr.bf16.gmra.mrb[0].mxu0 %v609
        %v645 = vpop.f32.mrb[0].mxu0
        %v646 = vadd.f32 %v593, %v645
        %v647 = vpop.f32.mrb[0].mxu0
        %v648 = vpop.f32.mrb[0].mxu0
        %v649 = vadd.f32 %v593, %v648
        %v650 = vpop.f32.mrb[0].mxu0
        %651 = vdwg.mxu0
        %v652 = vpack.c.bf16 %v649, %v646
        %v654 = vunpack.c.l.b16 %v652
        %v655 = vunpack.c.h.b16 %v652
        %v656 = vpack.c.b16 %v654, %v654
        %v657 = vpack.c.b16 %v655, %v655
        %660 = vst [vmem:[%s380] sm:$0xf] %v656
        %661 = vst [vmem:[%s380 + $0x4] sm:$0xf] %v657
        %s662 = sand.u32 %s209, 1
        %s663 = scalar_lea.sflag [#allocation5], %s662
        %s664 = sand.u32 %s209, 1
        %s665 = smul.addr %s664, 8
        %s666 = scalar_lea.vmem [#allocation4], %s665
        // Predicated region
        $region94: #{bert_lm_prediction_head.1} parent=84 // pred_check
          %p667 = pneg %p219
        $region95: #{bert_lm_prediction_head.1} parent=84 // pred_check_branch
          %669 = sbr.rel (%p667) target = $region97
        $region96: #{bert_lm_prediction_head.1} parent=84 // pred_region
          %s670 = smul.u32 2, %s26
          %s672 = ssub.s32 128, 128
          %673 = vsyncadd %s663, %s672
          %s674 = smul.addr %s670, 2
          %s675 = sadd.s32 %s25, %s674
          %s676 = smul.addr %s675, 64
          %s677 = scalar_lea.hbm %s7, %s676
          %s678 = sshll.u32 %s666, 4
          %s679 = int_to_ptr.vmem [resolvable:$true] %s678
          %684 = dma.vmem_to_hbm [thread:$0]  %s679, 128, %s677, %s663, 64, 128, 4
        $region97: #{bert_lm_prediction_head.1} parent=84 // pred_fallthru
          _
      $region85: #{bert_lm_prediction_head.1} parent=5 // pred_fallthru
        _
      %p685 = scmp.le.s32.totalorder 2, %s16
      // Predicated region
      $region98: #{bert_lm_prediction_head.1} parent=5 // pred_check
        %p686 = pneg %p685
      $region99: #{bert_lm_prediction_head.1} parent=5 // pred_check_branch
        %688 = sbr.rel (%p686) target = $region101
      $region100: #{bert_lm_prediction_head.1} parent=5 // pred_region
        %s689 = ssub.s32 %s16, 2
        // Predicated region
        $region102: #{bert_lm_prediction_head.1} parent=100 // pred_check
          %p690 = pneg %p225
        $region103: #{bert_lm_prediction_head.1} parent=100 // pred_check_branch
          %692 = sbr.rel (%p690) target = $region105
        $region104: #{bert_lm_prediction_head.1} parent=100 // pred_region
          %s693 = sand.u32 %s210, 1
          %s694 = scalar_lea.sflag [#allocation5], %s693
          %s695 = sand.u32 %s210, 1
          %s696 = smul.addr %s695, 8
          %s697 = scalar_lea.vmem [#allocation4], %s696
          %698 = dma.done %s694, 128
        $region105: #{bert_lm_prediction_head.1} parent=100 // pred_fallthru
          _
      $region101: #{bert_lm_prediction_head.1} parent=5 // pred_fallthru
        _
    $region6: #{bert_lm_prediction_head.1} parent=1 // loop_footer
      %s20 = sadd.s32 1, %s16
    $region7: #{bert_lm_prediction_head.1} parent=1 // loop_footer_branch
      %15 = sbr.rel target = $region3
    $region8: #{bert_lm_prediction_head.1} parent=1 // loop_exit
      _
    %699 = vsyncpa [#allocation5], 1
    %s700 = scalar_lea.sflag [#allocation5], 1
    %701 = vsyncpa %s700, 1

</llo_original>
